<compile_context>
chip_gen: v7x
topology: tpu7x:2x2x1
jax: 0.10.0
libtpu: 0.0.40
codegen_flags: <defaults>
</compile_context>

<pallas_src>
import math

import jax
import jax.numpy as jnp
from jax.experimental import pallas as pl
from jax.experimental.pallas import tpu as pltpu


def _round_up(x: int, m: int) -> int:
    return ((x + m - 1) // m) * m


def _choose_tb(b_pad: int, out_dim: int) -> int:
    """Batch-tile rows: multiple of 8, VMEM-budget aware, >=2 grid steps when possible."""
    # Output tile VMEM cost: last dim occupies round_up(out_dim,128) lanes, f32,
    # double-buffered.  8 MiB budget stays well inside v5e's 16 MiB scoped default
    # (and is tiny vs v6e 32 MiB / v7x 32 MiB scoped).
    row_bytes = _round_up(out_dim, 128) * 4
    budget = 8 * 1024 * 1024
    tb = min(512, max(8, (budget // (2 * row_bytes)) // 8 * 8))
    # Ensure at least 2 grid steps for moderate batches so dimension_semantics
    # ("parallel",) can shard the batch axis across both v7x TensorCores.
    if b_pad >= 16:
        n_steps = max(2, -(-b_pad // tb))
        tb = min(tb, _round_up(-(-b_pad // n_steps), 8))
    return max(8, min(tb, b_pad))


def _pos_emb_kernel(x_ref, w_ref, out_ref):
    # x_ref:   (TB, 1)          f32 timesteps (batch on sublanes)
    # w_ref:   (1, half)        f32 learned frequencies (raw, unscaled)
    # out_ref: (TB, emb_dim+1)  f32 -> [ x | sin | cos | (zero col iff emb_dim odd) ]
    half = w_ref.shape[-1]
    out_dim = out_ref.shape[-1]

    x = x_ref[...]                                   # (TB, 1)
    # Same op order as the reference: ((x * w) * 2) * pi  -> no fp reordering drift.
    freqs = x * w_ref[...] * 2.0 * math.pi           # (TB, half) VPU broadcast multiply

    out_ref[:, 0:1] = x                              # passthrough x column
    out_ref[:, 1:1 + half] = jnp.sin(freqs)          # EUP
    out_ref[:, 1 + half:1 + 2 * half] = jnp.cos(freqs)

    tail = out_dim - (1 + 2 * half)                  # 1 iff emb_dim is odd, else 0
    if tail:                                         # static
        out_ref[:, 1 + 2 * half:] = jnp.zeros((x.shape[0], tail), out_ref.dtype)


def learned_sinusoidal_pos_emb(x, weights, emb_dim):
    """x: (B,) timesteps; weights: (emb_dim // 2,) learned frequencies.

    Returns (B, emb_dim + 1): [x | sin(2*pi*x*w) | cos(2*pi*x*w) | (zero pad if odd)].
    """
    B = x.shape[0]
    half = emb_dim // 2
    assert half >= 1, "emb_dim must be >= 2"
    out_dim = emb_dim + 1

    x_f32 = x.astype(jnp.float32)
    w2 = weights.astype(jnp.float32).reshape(1, half)

    # Pad batch only to a multiple of 8 (sublane granularity); let the grid be ragged.
    B_pad = _round_up(B, 8)
    TB = _choose_tb(B_pad, out_dim)
    grid = (pl.cdiv(B_pad, TB),)

    x2 = jnp.pad(x_f32[:, None], ((0, B_pad - B), (0, 0)))

    out = pl.pallas_call(
        _pos_emb_kernel,
        out_shape=jax.ShapeDtypeStruct((B_pad, out_dim), jnp.float32),
        grid=grid,
        in_specs=[
            pl.BlockSpec((TB, 1), lambda i: (i, 0)),      # x tile marches over batch
            pl.BlockSpec((1, half), lambda i: (0, 0)),    # weights stay resident
        ],
        out_specs=pl.BlockSpec((TB, out_dim), lambda i: (i, 0)),
        compiler_params=pltpu.CompilerParams(
            dimension_semantics=("parallel",)),           # shard batch across TCs (v7x)
        cost_estimate=pl.CostEstimate(
            flops=3 * B_pad * half,
            transcendentals=2 * B_pad * half,
            bytes_accessed=4 * (B_pad + half + B_pad * out_dim)),
    )(x2, w2)

    # Padded batch rows (if any) are garbage for column 0 and sliced away here.
    return out[:B]


def _reference(x, weights, emb_dim):
    # Pure-JAX mirror of the PyTorch forward (same op order).
    x = x[:, None].astype(jnp.float32)
    freqs = x * weights[None, :].astype(jnp.float32) * 2.0 * math.pi
    fouriered = jnp.concatenate([jnp.sin(freqs), jnp.cos(freqs)], axis=-1)
    fouriered = jnp.concatenate([x, fouriered], axis=-1)
    if emb_dim % 2 == 1:
        fouriered = jnp.pad(fouriered, ((0, 0), (0, 1)))
    return fouriered


def _check(emb_dim, batch, key):
    k_x, k_w = jax.random.split(key)
    # Continuous diffusion timesteps in [0, 1): keeps sin/cos arguments small so the
    # comparison against the pure-JAX reference is not dominated by |arg|*eps drift.
    x = jax.random.uniform(k_x, (batch,), dtype=jnp.float32)
    weights = jax.random.normal(k_w, (emb_dim // 2,), dtype=jnp.float32)

    out = jax.block_until_ready(learned_sinusoidal_pos_emb(x, weights, emb_dim))
    ref = _reference(x, weights, emb_dim)

    assert out.shape == (batch, emb_dim + 1), out.shape
    assert jnp.allclose(out, ref, atol=5e-5, rtol=5e-5), (
        f"mismatch vs reference (emb_dim={emb_dim})")


if __name__ == "__main__":
    key = jax.random.PRNGKey(0)
    k0, k1 = jax.random.split(key)
    _check(emb_dim=16, batch=8, key=k0)   # even emb_dim -> (8, 17)
    _check(emb_dim=15, batch=10, key=k1)  # odd emb_dim path (+ ragged batch) -> (10, 16)
    print("KERNEL_OK")
</pallas_src>

<mosaic_0001>
module attributes {stable_mosaic.version = 11 : i64} {
  func.func @_pos_emb_kernel(%arg0: i32, %arg1: memref<8x1xf32, #tpu.memory_space<vmem>>, %arg2: memref<1x8xf32, #tpu.memory_space<vmem>>, %arg3: memref<8x17xf32, #tpu.memory_space<vmem>>) attributes {dimension_semantics = [#tpu.dimension_semantics<parallel>], iteration_bounds = array<i64: 1>, scalar_prefetch = 0 : i64, scratch_operands = 0 : i64, tpu.core_type = #tpu.core_type<tc>, window_params = [{transform_indices = @transform_0, window_bounds = array<i64: 8, 1>}, {pipeline_mode = #tpu.pipeline_mode<synchronous>, transform_indices = @transform_1, window_bounds = array<i64: 1, 8>}, {transform_indices = @transform_2, window_bounds = array<i64: 8, 17>}]} {
    %c0 = arith.constant 0 : index
    %c0_0 = arith.constant 0 : index
    %0 = vector.load %arg1[%c0, %c0_0] : memref<8x1xf32, #tpu.memory_space<vmem>>, vector<8x1xf32>
    %c0_1 = arith.constant 0 : index
    %c0_2 = arith.constant 0 : index
    %1 = vector.load %arg2[%c0_1, %c0_2] : memref<1x8xf32, #tpu.memory_space<vmem>>, vector<1x8xf32>
    %2 = vector.broadcast %0 : vector<8x1xf32> to vector<8x8xf32>
    %3 = vector.broadcast %1 : vector<1x8xf32> to vector<8x8xf32>
    %4 = arith.mulf %2, %3 : vector<8x8xf32>
    %cst = arith.constant 2.000000e+00 : f32
    %5 = vector.broadcast %cst : f32 to vector<8x8xf32>
    %6 = arith.mulf %4, %5 : vector<8x8xf32>
    %cst_3 = arith.constant 3.14159274 : f32
    %7 = vector.broadcast %cst_3 : f32 to vector<8x8xf32>
    %8 = arith.mulf %6, %7 : vector<8x8xf32>
    %c0_4 = arith.constant 0 : index
    %c0_5 = arith.constant 0 : index
    %9 = vector.load %arg3[%c0_4, %c0_5] : memref<8x17xf32, #tpu.memory_space<vmem>>, vector<8x1xf32>
    tpu.vector_store %arg3[%c0_4, %c0_5], %0 {strides = array<i32>} : memref<8x17xf32, #tpu.memory_space<vmem>>, vector<8x1xf32>,
    %10 = math.sin %8 : vector<8x8xf32>
    %c0_6 = arith.constant 0 : index
    %c1 = arith.constant 1 : index
    %11 = vector.load %arg3[%c0_6, %c1] : memref<8x17xf32, #tpu.memory_space<vmem>>, vector<8x8xf32>
    tpu.vector_store %arg3[%c0_6, %c1], %10 {strides = array<i32>} : memref<8x17xf32, #tpu.memory_space<vmem>>, vector<8x8xf32>,
    %12 = math.cos %8 : vector<8x8xf32>
    %c0_7 = arith.constant 0 : index
    %c9 = arith.constant 9 : index
    %13 = vector.load %arg3[%c0_7, %c9] : memref<8x17xf32, #tpu.memory_space<vmem>>, vector<8x8xf32>
    tpu.vector_store %arg3[%c0_7, %c9], %12 {strides = array<i32>} : memref<8x17xf32, #tpu.memory_space<vmem>>, vector<8x8xf32>,
    return
  }
  func.func @transform_0(%arg0: i32) -> (i32, i32) {
    %c0_i32 = arith.constant 0 : i32
    %c0_i32_0 = arith.constant 0 : i32
    return %arg0, %c0_i32 : i32, i32
  }
  func.func @transform_1(%arg0: i32) -> (i32, i32) {
    %c0_i32 = arith.constant 0 : i32
    %c0_i32_0 = arith.constant 0 : i32
    %c0_i32_1 = arith.constant 0 : i32
    return %c0_i32, %c0_i32_0 : i32, i32
  }
  func.func @transform_2(%arg0: i32) -> (i32, i32) {
    %c0_i32 = arith.constant 0 : i32
    %c0_i32_0 = arith.constant 0 : i32
    return %arg0, %c0_i32 : i32, i32
  }
}

</mosaic_0001>

<llo_original>
// kernel: tpu_custom_call.1
$region0: #{tpu_custom_call.1}
  #allocation0 [shape = 'u32[]', space=smem, size = 0x4, offset = 0x4, fixed_abs, tag = 'smem constant byte address 0x4 - core index']
  #allocation1 [shape = 'u32[144,128]{1,0:T(1,128)}', space=vmem, size = 0x12000, scoped, tag = 'internal scratch']
  %s0 = inlined_call_operand.vmem [shape: f32[8,1], index: 0, kind: input, shape index: {}]
  %s1 = inlined_call_operand.vmem [shape: f32[1,8], index: 1, kind: input, shape index: {}]
  %s2 = inlined_call_operand.hbm [shape: f32[8,17], index: 2, kind: output, shape index: {}]
  %s3 = sld [smem:[#allocation0]]
  $region18: #{tpu_custom_call.1} parent=0
    _
  %s5 = ssub.s32 1, %s3
  %s6 = scalar_select 0, %s5, %s3
  $region1: #{tpu_custom_call.1} parent=0
    #allocation2 [shape = 'u8[4096]{0}', space=vmem, size = 0x1000, scoped, tag = 'output window, operand 0, single buffered']
    #allocation3 [shape = 's32[1]{0}', space=sflag, size = 0x4, scoped, tag = 'scoped memory for tpu_custom_call.1']
    %7 = vsyncpa [#allocation3], 0
    // Predicated region
    $region2: #{tpu_custom_call.1} parent=1 // pred_check
      _
    $region3: #{tpu_custom_call.1} parent=1 // pred_check_branch
      %9 = sbr.rel (0) target = $region5
    $region4: #{tpu_custom_call.1} parent=1 // pred_region
      _
    $region5: #{tpu_custom_call.1} parent=1 // pred_fallthru
      _
    // Predicated region
    $region6: #{tpu_custom_call.1} parent=1 // pred_check
      _
    $region7: #{tpu_custom_call.1} parent=1 // pred_check_branch
      %11 = sbr.rel (0) target = $region9
    $region8: #{tpu_custom_call.1} parent=1 // pred_region
      _
    $region9: #{tpu_custom_call.1} parent=1 // pred_fallthru
      _
    %v12 = vld [vmem:[%s0] sm:$0xff]
    %v13 = vld [vmem:[%s1] sm:$0x1]
    %15 = vset.pattern.permute.xlu0 0
    %16 = vperm.xlu0 %15, %v12
    %v17 = vpop.permute.xlu0 %16
    %v20 = vlaneseq
    %v21 = vshrl.u32 %v20, 7
    %v22 = vsub.s32 0, %v21
    %v23 = vrot.slane %v13, %v22
    %v25 = vmul.f32 %v17, %v23
    %v26 = vmul.f32 %v25, 2.0
    %v27 = vmul.f32 %v26, 3.1415927
    %vm28 = vcmask 7168
    %29 = vst.msk [vmem:[#allocation2] sm:$0xff] %vm28, %v12
    %v30 = vand.u32 2147483647, %v27
    %vm31 = vcmp.le.f32.partialorder %v30, 0.7853982
    %vm32 = vcmp.lt.s32.totalorder %v27, 0
    %v33 = vand.u32 %v27, 2139095040
    %v34 = vshrl.u32 %v33, 23
    %v35 = vsub.s32 %v34, 127
    %v36 = vand.u32 2147483647, %v27
    %v37 = vand.u32 %v36, 8388607
    %v38 = vor.u32 %v37, 8388608
    %v39 = vsub.s32 0, %v38
    %v40 = vadd.s32 %v35, 1
    %vm41 = vcmp.gt.s32.totalorder %v40, 0
    %v42 = vsel %vm41, %v40, 0
    %v43 = vshrl.u32 %v42, 5
    %v44 = vand.u32 %v42, 31
    %v45 = vsub.s32 32, %v44
    %v46 = vshrl.u32 683565275, %v45
    %v47 = vshll.u32 683565275, %v44
    %v48 = vshrl.u32 2475754826, %v45
    %v49 = vor.u32 %v47, %v48
    %v50 = vshll.u32 2475754826, %v44
    %v51 = vshrl.u32 2131351028, %v45
    %v52 = vor.u32 %v50, %v51
    %v53 = vshll.u32 2131351028, %v44
    %v54 = vshrl.u32 2102212464, %v45
    %v55 = vor.u32 %v53, %v54
    %v56 = vshll.u32 2102212464, %v44
    %v57 = vshrl.u32 920167782, %v45
    %v58 = vor.u32 %v56, %v57
    %v59 = vshll.u32 920167782, %v44
    %v60 = vshrl.u32 1326507024, %v45
    %v61 = vor.u32 %v59, %v60
    %vm62 = vcmp.lt.s32.totalorder %v43, 1
    %vm63 = vcmp.lt.s32.totalorder %v43, 2
    %vm64 = vcmp.lt.s32.totalorder %v43, 3
    %vm65 = vcmp.lt.s32.totalorder %v43, 4
    %v66 = vsel %vm62, %v46, %v49
    %v67 = vsel %vm65, %v55, 2102212464
    %v68 = vsel %vm64, %v52, %v67
    %v69 = vsel %vm63, %v66, %v68
    %v70 = vsel %vm62, %v49, %v52
    %v71 = vsel %vm65, %v58, 920167782
    %v72 = vsel %vm64, %v55, %v71
    %v73 = vsel %vm63, %v70, %v72
    %v74 = vsel %vm62, %v52, %v55
    %v75 = vsel %vm65, %v61, 1326507024
    %v76 = vsel %vm64, %v58, %v75
    %v77 = vsel %vm63, %v74, %v76
    %v78 = vshll.u32 %v38, 8
    %v79 = vmul.u32.u64.compose %v78, %v77
    %v80 = vextract.low.u32 %v79
    %v81 = vextract.high.u32 %v79
    %v82 = vmul.u32.u64.compose %v78, %v73
    %v83 = vextract.low.u32 %v82
    %v84 = vextract.high.u32 %v82
    %v85 = vmul.u32 %v78, %v69
    %v86 = vadd.s32 %v81, %v83
    %vm87 = vc.u32 %v81, %v83
    %v88 = vadd.s32 %v84, 1
    %v89 = vsel %vm87, %v88, %v84
    %v90 = vadd.s32 %v85, %v89
    %v91 = vadd.s32 %v90, 536870912
    %v92 = vshrl.u32 %v91, 30
    %v93 = vshll.u32 %v92, 30
    %v94 = vsub.s32 %v90, %v93
    %vm95 = vcmp.lt.s32.totalorder %v94, 0
    %v96 = vsub.s32 0, %v94
    %v97 = vsel %vm95, %v96, %v94
    %v98 = vclz %v97
    %v99 = vsub.s32 %v98, 2
    %vm100 = vcmp.gt.s32.totalorder 0, %v99
    %v101 = vsel %vm100, 0, %v99
    %v102 = vsub.s32 32, %v101
    %v103 = vshll.u32 %v94, %v101
    %v104 = vshrl.u32 %v86, %v102
    %v105 = vor.u32 %v103, %v104
    %v106 = vsub.s32 4294967266, %v101
    %v107 = vadd.s32 %v106, 127
    %v108 = vshll.u32 %v107, 23
    %v109 = vor.u32 4788187, %v108
    %v110 = vand.u32 2147483647, %v109
    %v112 = vcvt.s32.f32 %v105
    %v113 = vmul.f32 %v112, %v110
    %v114 = vxor.u32 %v113, 2147483648
    %v115 = vsel %vm32, %v114, %v113
    %v116 = vsub.s32 4, %v92
    %v117 = vsel %vm32, %v116, %v92
    %v118 = vsel %vm31, %v27, %v115
    %v119 = vsel %vm31, 0, %v117
    %v120 = vcosq.f32.pop %v118
    %v121 = vsinq.f32.pop %v118
    %vm122 = vweird.f32 %v27
    %v123 = vadd.s32 %v119, 3
    %v124 = vand.u32 %v123, 3
    %vm125 = vcmp.lt.s32.totalorder %v124, 2
    %vm126 = vcmp.eq.s32.totalorder %v124, 0
    %v127 = vxor.u32 %v121, 2147483648
    %v128 = vsel %vm126, %v120, %v127
    %vm129 = vcmp.eq.s32.totalorder %v124, 2
    %v130 = vxor.u32 %v120, 2147483648
    %v131 = vsel %vm129, %v130, %v121
    %v132 = vsel %vm125, %v128, %v131
    %v133 = vsel %vm122, nan, %v132
    %135 = vrot.lane.b32.xlu0 %v133, 1
    %v136 = vpop.permute.xlu0 %135
    %vm138 = vcmask 72712
    %139 = vst.msk [vmem:[#allocation2] sm:$0xff] %vm138, %v136
    %v140 = vand.u32 2147483647, %v27
    %vm141 = vcmp.le.f32.partialorder %v140, 0.7853982
    %vm142 = vcmp.lt.s32.totalorder %v27, 0
    %v143 = vand.u32 %v27, 2139095040
    %v144 = vshrl.u32 %v143, 23
    %v145 = vsub.s32 %v144, 127
    %v146 = vand.u32 2147483647, %v27
    %v147 = vand.u32 %v146, 8388607
    %v148 = vor.u32 %v147, 8388608
    %v149 = vsub.s32 0, %v148
    %v150 = vadd.s32 %v145, 1
    %vm151 = vcmp.gt.s32.totalorder %v150, 0
    %v152 = vsel %vm151, %v150, 0
    %v153 = vshrl.u32 %v152, 5
    %v154 = vand.u32 %v152, 31
    %v155 = vsub.s32 32, %v154
    %v156 = vshrl.u32 683565275, %v155
    %v157 = vshll.u32 683565275, %v154
    %v158 = vshrl.u32 2475754826, %v155
    %v159 = vor.u32 %v157, %v158
    %v160 = vshll.u32 2475754826, %v154
    %v161 = vshrl.u32 2131351028, %v155
    %v162 = vor.u32 %v160, %v161
    %v163 = vshll.u32 2131351028, %v154
    %v164 = vshrl.u32 2102212464, %v155
    %v165 = vor.u32 %v163, %v164
    %v166 = vshll.u32 2102212464, %v154
    %v167 = vshrl.u32 920167782, %v155
    %v168 = vor.u32 %v166, %v167
    %v169 = vshll.u32 920167782, %v154
    %v170 = vshrl.u32 1326507024, %v155
    %v171 = vor.u32 %v169, %v170
    %vm172 = vcmp.lt.s32.totalorder %v153, 1
    %vm173 = vcmp.lt.s32.totalorder %v153, 2
    %vm174 = vcmp.lt.s32.totalorder %v153, 3
    %vm175 = vcmp.lt.s32.totalorder %v153, 4
    %v176 = vsel %vm172, %v156, %v159
    %v177 = vsel %vm175, %v165, 2102212464
    %v178 = vsel %vm174, %v162, %v177
    %v179 = vsel %vm173, %v176, %v178
    %v180 = vsel %vm172, %v159, %v162
    %v181 = vsel %vm175, %v168, 920167782
    %v182 = vsel %vm174, %v165, %v181
    %v183 = vsel %vm173, %v180, %v182
    %v184 = vsel %vm172, %v162, %v165
    %v185 = vsel %vm175, %v171, 1326507024
    %v186 = vsel %vm174, %v168, %v185
    %v187 = vsel %vm173, %v184, %v186
    %v188 = vshll.u32 %v148, 8
    %v189 = vmul.u32.u64.compose %v188, %v187
    %v190 = vextract.low.u32 %v189
    %v191 = vextract.high.u32 %v189
    %v192 = vmul.u32.u64.compose %v188, %v183
    %v193 = vextract.low.u32 %v192
    %v194 = vextract.high.u32 %v192
    %v195 = vmul.u32 %v188, %v179
    %v196 = vadd.s32 %v191, %v193
    %vm197 = vc.u32 %v191, %v193
    %v198 = vadd.s32 %v194, 1
    %v199 = vsel %vm197, %v198, %v194
    %v200 = vadd.s32 %v195, %v199
    %v201 = vadd.s32 %v200, 536870912
    %v202 = vshrl.u32 %v201, 30
    %v203 = vshll.u32 %v202, 30
    %v204 = vsub.s32 %v200, %v203
    %vm205 = vcmp.lt.s32.totalorder %v204, 0
    %v206 = vsub.s32 0, %v204
    %v207 = vsel %vm205, %v206, %v204
    %v208 = vclz %v207
    %v209 = vsub.s32 %v208, 2
    %vm210 = vcmp.gt.s32.totalorder 0, %v209
    %v211 = vsel %vm210, 0, %v209
    %v212 = vsub.s32 32, %v211
    %v213 = vshll.u32 %v204, %v211
    %v214 = vshrl.u32 %v196, %v212
    %v215 = vor.u32 %v213, %v214
    %v216 = vsub.s32 4294967266, %v211
    %v217 = vadd.s32 %v216, 127
    %v218 = vshll.u32 %v217, 23
    %v219 = vor.u32 4788187, %v218
    %v220 = vand.u32 2147483647, %v219
    %v222 = vcvt.s32.f32 %v215
    %v223 = vmul.f32 %v222, %v220
    %v224 = vxor.u32 %v223, 2147483648
    %v225 = vsel %vm142, %v224, %v223
    %v226 = vsub.s32 4, %v202
    %v227 = vsel %vm142, %v226, %v202
    %v228 = vsel %vm141, %v27, %v225
    %v229 = vsel %vm141, 0, %v227
    %v230 = vcosq.f32.pop %v228
    %v231 = vsinq.f32.pop %v228
    %vm232 = vweird.f32 %v27
    %v233 = vand.u32 %v229, 3
    %vm234 = vcmp.lt.s32.totalorder %v233, 2
    %vm235 = vcmp.eq.s32.totalorder %v233, 0
    %v236 = vxor.u32 %v231, 2147483648
    %v237 = vsel %vm235, %v230, %v236
    %vm238 = vcmp.eq.s32.totalorder %v233, 2
    %v239 = vxor.u32 %v230, 2147483648
    %v240 = vsel %vm238, %v239, %v231
    %v241 = vsel %vm234, %v237, %v240
    %v242 = vsel %vm232, nan, %v241
    %244 = vrot.lane.b32.xlu0 %v242, 9
    %v245 = vpop.permute.xlu0 %244
    %vm247 = vcmask 138312
    %248 = vst.msk [vmem:[#allocation2] sm:$0xff] %vm247, %v245
    // Predicated region
    $region10: #{tpu_custom_call.1} parent=1 // pred_check
      _
    $region11: #{tpu_custom_call.1} parent=1 // pred_check_branch
      %250 = sbr.rel (0) target = $region13
    $region12: #{tpu_custom_call.1} parent=1 // pred_region
      %s252 = ssub.s32 128, 128
      %253 = vsyncadd [#allocation3], %s252
      %s255 = sshll.u32 [#allocation2], 4
      %s256 = int_to_ptr.vmem [resolvable:$true] %s255
      %258 = dma.vmem_to_hbm [thread:$0]  %s256, 128, %s2, [#allocation3]
    $region13: #{tpu_custom_call.1} parent=1 // pred_fallthru
      _
    // Predicated region
    $region14: #{tpu_custom_call.1} parent=1 // pred_check
      _
    $region15: #{tpu_custom_call.1} parent=1 // pred_check_branch
      %260 = sbr.rel (0) target = $region17
    $region16: #{tpu_custom_call.1} parent=1 // pred_region
      %261 = dma.done [#allocation3], 128
    $region17: #{tpu_custom_call.1} parent=1 // pred_fallthru
      _
    %262 = vsyncpa [#allocation3], 1

</llo_original>
